<compile_context>
chip_gen: v7x
topology: tpu7x:2x2x1
jax: 0.10.0
libtpu: 0.0.40
codegen_flags: <defaults>
</compile_context>

<pallas_src>
import jax
import jax.numpy as jnp
from jax.experimental import pallas as pl
from jax.experimental.pallas import tpu as pltpu

# ---------------- model hyper-parameters (small, synthetic) ----------------
INPUT_SIZE = 32        # vocab size (num_embeddings)
OUTPUT_SIZE = 8        # number of nationality classes
EMBEDDING_DIM = 16
HIDDEN_SIZE = 32
NUM_RNN_LAYERS = 2     # kernel implements the 2-layer stacked vanilla (tanh) RNN
DROPOUT = 0.0          # eval mode -> dropout is identity

BATCH = 2
SEQ_LEN = 8

H = HIDDEN_SIZE
H2 = 2 * HIDDEN_SIZE
OUT_PAD = 128          # lane-dense padded output width (true logits in [:, :OUTPUT_SIZE])

# --- packed-parameter slab layout (row offsets; every block lane-padded to 128) ---
ROW_TBL = 0                       # (V, 2H)  : [emb[v] @ Wih0 + b0 | b1]
ROW_WBLK = ROW_TBL + INPUT_SIZE   # (2H, 2H) : [[Whh0, Wih1], [0, Whh1]]
ROW_WD1 = ROW_WBLK + H2           # (H, H)   : dense1 weight
ROW_WD2 = ROW_WD1 + H             # (H, 128) : dense2 weight, zero-padded past OUTPUT_SIZE
ROW_BD1 = ROW_WD2 + H             # (1, H)   : dense1 bias   (8-row aligned block)
ROW_BD2 = ROW_BD1 + 8             # (1, 128) : dense2 bias, zero-padded
SLAB_ROWS = ROW_BD2 + 8           # = 176


def rnn_predictor_kernel(x_ref, len_ref, slab_ref, out_ref):
    """Fused 2-layer tanh-RNN wavefront + dense1/ReLU/dense2 head.

    x_ref    : SMEM (B, T) int32 token ids
    len_ref  : VMEM (B, 1) int32 sequence lengths
    slab_ref : VMEM (SLAB_ROWS, 128) f32 packed parameters (layout above)
    out_ref  : VMEM (B, 128) f32 padded logits (true logits in lanes 0:OUTPUT_SIZE)
    """
    B, T = x_ref.shape
    lengths = len_ref[...]                                    # (B, 1) int32

    # --- per-step additive terms, gathered from the folded table --------------
    # add_t = [x_t @ Wih0 + b0 | b1]  (B, 2H).  Independent of the recurrent state
    # -> entirely off the serial critical chain.  For the last wavefront iteration
    # (t == T) only the layer-1 half (== b1 in every table row) is used, so any
    # row index works; use 0.
    adds = []
    for t in range(T + 1):
        rows = []
        for b in range(B):
            idx = x_ref[b, t] if t < T else 0
            rows.append(slab_ref[pl.ds(idx, 1), 0:H2])        # (1, 2H)
        adds.append(jnp.concatenate(rows, axis=0))            # (B, 2H)

    # --- per-step update masks (pure function of lengths; hoisted) ------------
    # lanes 0:H  -> layer-0 step t   : update iff t   < lengths
    # lanes H:2H -> layer-1 step t-1 : update iff t-1 < lengths
    # thresholds at the wavefront edges (t==0 upper half, t==T lower half) are
    # forced to T so the comparison is always False (lengths <= T).
    masks = []
    for t in range(T + 1):
        thr0 = t if t < T else T
        thr1 = (t - 1) if t >= 1 else T
        thr = jnp.concatenate(
            [jnp.full((1, H), thr0, jnp.int32),
             jnp.full((1, H), thr1, jnp.int32)], axis=1)       # (1, 2H) constant
        masks.append(thr < lengths)                            # (B, 2H) bool

    w_blk = slab_ref[ROW_WBLK:ROW_WBLK + H2, 0:H2]             # (2H, 2H)

    # --- wavefront recurrence: one MXU dot + one tanh + one select per step ----
    # hcat = [h0 | h1]; hcat @ W_blk = [h0@Whh0 | h0@Wih1 + h1@Whh1], so the lower
    # lanes advance layer-0 to step t while the upper lanes advance layer-1 to
    # step t-1 (both consume the same pre-update hcat, which is the correct
    # wavefront ordering).  Fully unrolled (T is small and static).
    hcat = jnp.zeros((B, H2), jnp.float32)
    for t in range(T + 1):
        blk = jnp.dot(hcat, w_blk, preferred_element_type=jnp.float32)
        hcat = jnp.where(masks[t], jnp.tanh(blk + adds[t]), hcat)

    # --- head: dense1 -> ReLU -> (dropout identity in eval) -> dense2 ---------
    # TODO(synk): nn.Dropout(p) at train time not implemented; eval-mode identity.
    h1 = hcat[:, H:]                                           # final top-layer hidden
    wd1 = slab_ref[ROW_WD1:ROW_WD1 + H, 0:H]
    bd1 = slab_ref[ROW_BD1:ROW_BD1 + 1, 0:H]
    z = jnp.maximum(
        jnp.dot(h1, wd1, preferred_element_type=jnp.float32) + bd1, 0.0)
    wd2 = slab_ref[ROW_WD2:ROW_WD2 + H, :]                     # (H, 128), zero past O
    bd2 = slab_ref[ROW_BD2:ROW_BD2 + 1, :]                     # (1, 128), zero past O
    out_ref[...] = jnp.dot(z, wd2, preferred_element_type=jnp.float32) + bd2


def init_params(key):
    """Deterministic parameter init matching the PyTorch module's shapes.

    RNN / Linear weights stored transposed to (in, out); biases as (1, out);
    the two RNN bias vectors (b_ih + b_hh) of each layer pre-summed.
    """
    ks = jax.random.split(key, 16)
    k = 1.0 / jnp.sqrt(HIDDEN_SIZE)

    def u(kk, shape):
        return jax.random.uniform(kk, shape, jnp.float32, minval=-k, maxval=k)

    emb = jax.random.normal(ks[0], (INPUT_SIZE, EMBEDDING_DIM), jnp.float32)
    emb = emb.at[0].set(0.0)                     # padding_idx=0

    return {
        "embedding": emb,
        "wih0": u(ks[1], (EMBEDDING_DIM, HIDDEN_SIZE)),
        "whh0": u(ks[2], (HIDDEN_SIZE, HIDDEN_SIZE)),
        "b0":   u(ks[3], (1, HIDDEN_SIZE)) + u(ks[4], (1, HIDDEN_SIZE)),
        "wih1": u(ks[5], (HIDDEN_SIZE, HIDDEN_SIZE)),
        "whh1": u(ks[6], (HIDDEN_SIZE, HIDDEN_SIZE)),
        "b1":   u(ks[7], (1, HIDDEN_SIZE)) + u(ks[8], (1, HIDDEN_SIZE)),
        "wd1": u(ks[9], (HIDDEN_SIZE, HIDDEN_SIZE)),
        "bd1": u(ks[10], (1, HIDDEN_SIZE)),
        "wd2": u(ks[11], (HIDDEN_SIZE, OUTPUT_SIZE)),
        "bd2": u(ks[12], (1, OUTPUT_SIZE)),
    }


def pack_params(params):
    """Fold + pack all parameters into the single kernel slab (done once at init)."""
    f32 = jnp.float32
    emb = params["embedding"].astype(f32)
    # Layer-0 input projection folded into the embedding table (bias included);
    # the upper half of every row carries the constant layer-1 bias so a gathered
    # row is directly the per-step additive term [x@Wih0 + b0 | b1].
    table0 = jnp.dot(emb, params["wih0"],
                     precision=jax.lax.Precision.HIGHEST) + params["b0"]       # (V, H)
    table2 = jnp.concatenate(
        [table0, jnp.broadcast_to(params["b1"], (INPUT_SIZE, H))], axis=1)     # (V, 2H)

    # Block recurrent weight: [h0|h1] @ W_blk = [h0@Whh0 | h0@Wih1 + h1@Whh1].
    w_blk = jnp.concatenate(
        [jnp.concatenate([params["whh0"], params["wih1"]], axis=1),
         jnp.concatenate([jnp.zeros((H, H), f32), params["whh1"]], axis=1)],
        axis=0)                                                                # (2H, 2H)

    def pad_block(a, rows):
        a = a.astype(f32)
        return jnp.pad(a, ((0, rows - a.shape[0]), (0, 128 - a.shape[1])))

    slab = jnp.concatenate([
        pad_block(table2, INPUT_SIZE),    # rows ROW_TBL  : folded embedding table
        pad_block(w_blk, H2),             # rows ROW_WBLK : block recurrent weight
        pad_block(params["wd1"], H),      # rows ROW_WD1  : dense1 weight
        pad_block(params["wd2"], H),      # rows ROW_WD2  : dense2 weight (lane-padded)
        pad_block(params["bd1"], 8),      # row  ROW_BD1  : dense1 bias
        pad_block(params["bd2"], 8),      # row  ROW_BD2  : dense2 bias (lane-padded)
    ], axis=0)
    assert slab.shape == (SLAB_ROWS, 128)
    return slab


def rnn_nationality_predictor(X, lengths, slab):
    """Forward pass. X: (B, T) int token ids; lengths: (B,) int; slab: packed params."""
    B, T = X.shape
    x_i32 = X.astype(jnp.int32)
    len_col = lengths.reshape(B, 1).astype(jnp.int32)

    # Grid-less call; whole working set (<100 KiB) resident in VMEM / SMEM.
    # (A batch grid with dimension_semantics=("parallel",) only pays off once the
    #  batch is scaled toward MXU width — not at B=2.)
    out_pad = pl.pallas_call(
        rnn_predictor_kernel,
        out_shape=jax.ShapeDtypeStruct((B, OUT_PAD), jnp.float32),
        in_specs=[
            pl.BlockSpec(memory_space=pltpu.MemorySpace.SMEM),   # token ids (scalars)
            pl.BlockSpec(memory_space=pltpu.MemorySpace.VMEM),   # lengths
            pl.BlockSpec(memory_space=pltpu.MemorySpace.VMEM),   # packed parameter slab
        ],
        out_specs=pl.BlockSpec(memory_space=pltpu.MemorySpace.VMEM),
    )(x_i32, len_col, slab)
    return out_pad[:, :OUTPUT_SIZE]


def reference_forward(X, lengths, params):
    """Pure-JAX reference mirroring PyTorch packed-RNN semantics."""
    hp = jax.lax.Precision.HIGHEST
    emb = params["embedding"][X].astype(jnp.float32)             # (B, T, D)
    B, T, _ = emb.shape

    def run_layer(inp, wih, whh, b):
        h = jnp.zeros((B, H), jnp.float32)
        outs = []
        for t in range(T):
            new = jnp.tanh(jnp.dot(inp[:, t], wih, precision=hp)
                           + jnp.dot(h, whh, precision=hp) + b)
            mask = (t < lengths)[:, None]
            h = jnp.where(mask, new, h)
            outs.append(h)
        return jnp.stack(outs, axis=1), h

    seq0, _ = run_layer(emb, params["wih0"], params["whh0"], params["b0"])
    _, h1 = run_layer(seq0, params["wih1"], params["whh1"], params["b1"])
    z = jax.nn.relu(jnp.dot(h1, params["wd1"], precision=hp) + params["bd1"])
    return jnp.dot(z, params["wd2"], precision=hp) + params["bd2"]


if __name__ == "__main__":
    key = jax.random.PRNGKey(0)
    pkey, xkey = jax.random.split(key)
    params = init_params(pkey)
    slab = pack_params(params)

    # deterministic example input: (B, T) token ids with trailing padding (id 0)
    X = jax.random.randint(xkey, (BATCH, SEQ_LEN), 1, INPUT_SIZE, dtype=jnp.int32)
    lengths = jnp.array([SEQ_LEN, 5], dtype=jnp.int32)
    pad_mask = jnp.arange(SEQ_LEN)[None, :] < lengths[:, None]
    X = jnp.where(pad_mask, X, 0)

    logits = rnn_nationality_predictor(X, lengths, slab)
    logits = jax.block_until_ready(logits)

    ref = reference_forward(X, lengths, params)
    assert logits.shape == (BATCH, OUTPUT_SIZE)
    # In-kernel dots use the MXU's default precision vs. the HIGHEST-precision
    # reference, so allow a modest tolerance.
    assert jnp.allclose(logits, ref, atol=1e-2, rtol=1e-2), (logits, ref)

    print("KERNEL_OK")
</pallas_src>

<mosaic_0001>
module attributes {stable_mosaic.version = 11 : i64} {
  func.func @rnn_predictor_kernel(%arg0: memref<2x8xi32, #tpu.memory_space<smem>>, %arg1: memref<2x1xi32, #tpu.memory_space<vmem>>, %arg2: memref<176x128xf32, #tpu.memory_space<vmem>>, %arg3: memref<2x128xf32, #tpu.memory_space<vmem>>) attributes {dimension_semantics = [], scalar_prefetch = 0 : i64, scratch_operands = 0 : i64, tpu.core_type = #tpu.core_type<tc>} {
    %c0 = arith.constant 0 : index
    %c0_0 = arith.constant 0 : index
    %0 = vector.load %arg1[%c0, %c0_0] : memref<2x1xi32, #tpu.memory_space<vmem>>, vector<2x1xi32>
    %c0_1 = arith.constant 0 : index
    %c0_2 = arith.constant 0 : index
    %1 = memref.load %arg0[%c0_1, %c0_2] : memref<2x8xi32, #tpu.memory_space<smem>>
    %2 = arith.index_cast %1 : i32 to index
    %c0_3 = arith.constant 0 : index
    %3 = vector.load %arg2[%2, %c0_3] : memref<176x128xf32, #tpu.memory_space<vmem>>, vector<1x64xf32>
    %c1 = arith.constant 1 : index
    %c0_4 = arith.constant 0 : index
    %4 = memref.load %arg0[%c1, %c0_4] : memref<2x8xi32, #tpu.memory_space<smem>>
    %5 = arith.index_cast %4 : i32 to index
    %c0_5 = arith.constant 0 : index
    %6 = vector.load %arg2[%5, %c0_5] : memref<176x128xf32, #tpu.memory_space<vmem>>, vector<1x64xf32>
    %7 = tpu.concatenate %3, %6 in 0 : vector<1x64xf32>, vector<1x64xf32> -> vector<2x64xf32>
    %c0_6 = arith.constant 0 : index
    %c1_7 = arith.constant 1 : index
    %8 = memref.load %arg0[%c0_6, %c1_7] : memref<2x8xi32, #tpu.memory_space<smem>>
    %9 = arith.index_cast %8 : i32 to index
    %c0_8 = arith.constant 0 : index
    %10 = vector.load %arg2[%9, %c0_8] : memref<176x128xf32, #tpu.memory_space<vmem>>, vector<1x64xf32>
    %c1_9 = arith.constant 1 : index
    %c1_10 = arith.constant 1 : index
    %11 = memref.load %arg0[%c1_9, %c1_10] : memref<2x8xi32, #tpu.memory_space<smem>>
    %12 = arith.index_cast %11 : i32 to index
    %c0_11 = arith.constant 0 : index
    %13 = vector.load %arg2[%12, %c0_11] : memref<176x128xf32, #tpu.memory_space<vmem>>, vector<1x64xf32>
    %14 = tpu.concatenate %10, %13 in 0 : vector<1x64xf32>, vector<1x64xf32> -> vector<2x64xf32>
    %c0_12 = arith.constant 0 : index
    %c2 = arith.constant 2 : index
    %15 = memref.load %arg0[%c0_12, %c2] : memref<2x8xi32, #tpu.memory_space<smem>>
    %16 = arith.index_cast %15 : i32 to index
    %c0_13 = arith.constant 0 : index
    %17 = vector.load %arg2[%16, %c0_13] : memref<176x128xf32, #tpu.memory_space<vmem>>, vector<1x64xf32>
    %c1_14 = arith.constant 1 : index
    %c2_15 = arith.constant 2 : index
    %18 = memref.load %arg0[%c1_14, %c2_15] : memref<2x8xi32, #tpu.memory_space<smem>>
    %19 = arith.index_cast %18 : i32 to index
    %c0_16 = arith.constant 0 : index
    %20 = vector.load %arg2[%19, %c0_16] : memref<176x128xf32, #tpu.memory_space<vmem>>, vector<1x64xf32>
    %21 = tpu.concatenate %17, %20 in 0 : vector<1x64xf32>, vector<1x64xf32> -> vector<2x64xf32>
    %c0_17 = arith.constant 0 : index
    %c3 = arith.constant 3 : index
    %22 = memref.load %arg0[%c0_17, %c3] : memref<2x8xi32, #tpu.memory_space<smem>>
    %23 = arith.index_cast %22 : i32 to index
    %c0_18 = arith.constant 0 : index
    %24 = vector.load %arg2[%23, %c0_18] : memref<176x128xf32, #tpu.memory_space<vmem>>, vector<1x64xf32>
    %c1_19 = arith.constant 1 : index
    %c3_20 = arith.constant 3 : index
    %25 = memref.load %arg0[%c1_19, %c3_20] : memref<2x8xi32, #tpu.memory_space<smem>>
    %26 = arith.index_cast %25 : i32 to index
    %c0_21 = arith.constant 0 : index
    %27 = vector.load %arg2[%26, %c0_21] : memref<176x128xf32, #tpu.memory_space<vmem>>, vector<1x64xf32>
    %28 = tpu.concatenate %24, %27 in 0 : vector<1x64xf32>, vector<1x64xf32> -> vector<2x64xf32>
    %c0_22 = arith.constant 0 : index
    %c4 = arith.constant 4 : index
    %29 = memref.load %arg0[%c0_22, %c4] : memref<2x8xi32, #tpu.memory_space<smem>>
    %30 = arith.index_cast %29 : i32 to index
    %c0_23 = arith.constant 0 : index
    %31 = vector.load %arg2[%30, %c0_23] : memref<176x128xf32, #tpu.memory_space<vmem>>, vector<1x64xf32>
    %c1_24 = arith.constant 1 : index
    %c4_25 = arith.constant 4 : index
    %32 = memref.load %arg0[%c1_24, %c4_25] : memref<2x8xi32, #tpu.memory_space<smem>>
    %33 = arith.index_cast %32 : i32 to index
    %c0_26 = arith.constant 0 : index
    %34 = vector.load %arg2[%33, %c0_26] : memref<176x128xf32, #tpu.memory_space<vmem>>, vector<1x64xf32>
    %35 = tpu.concatenate %31, %34 in 0 : vector<1x64xf32>, vector<1x64xf32> -> vector<2x64xf32>
    %c0_27 = arith.constant 0 : index
    %c5 = arith.constant 5 : index
    %36 = memref.load %arg0[%c0_27, %c5] : memref<2x8xi32, #tpu.memory_space<smem>>
    %37 = arith.index_cast %36 : i32 to index
    %c0_28 = arith.constant 0 : index
    %38 = vector.load %arg2[%37, %c0_28] : memref<176x128xf32, #tpu.memory_space<vmem>>, vector<1x64xf32>
    %c1_29 = arith.constant 1 : index
    %c5_30 = arith.constant 5 : index
    %39 = memref.load %arg0[%c1_29, %c5_30] : memref<2x8xi32, #tpu.memory_space<smem>>
    %40 = arith.index_cast %39 : i32 to index
    %c0_31 = arith.constant 0 : index
    %41 = vector.load %arg2[%40, %c0_31] : memref<176x128xf32, #tpu.memory_space<vmem>>, vector<1x64xf32>
    %42 = tpu.concatenate %38, %41 in 0 : vector<1x64xf32>, vector<1x64xf32> -> vector<2x64xf32>
    %c0_32 = arith.constant 0 : index
    %c6 = arith.constant 6 : index
    %43 = memref.load %arg0[%c0_32, %c6] : memref<2x8xi32, #tpu.memory_space<smem>>
    %44 = arith.index_cast %43 : i32 to index
    %c0_33 = arith.constant 0 : index
    %45 = vector.load %arg2[%44, %c0_33] : memref<176x128xf32, #tpu.memory_space<vmem>>, vector<1x64xf32>
    %c1_34 = arith.constant 1 : index
    %c6_35 = arith.constant 6 : index
    %46 = memref.load %arg0[%c1_34, %c6_35] : memref<2x8xi32, #tpu.memory_space<smem>>
    %47 = arith.index_cast %46 : i32 to index
    %c0_36 = arith.constant 0 : index
    %48 = vector.load %arg2[%47, %c0_36] : memref<176x128xf32, #tpu.memory_space<vmem>>, vector<1x64xf32>
    %49 = tpu.concatenate %45, %48 in 0 : vector<1x64xf32>, vector<1x64xf32> -> vector<2x64xf32>
    %c0_37 = arith.constant 0 : index
    %c7 = arith.constant 7 : index
    %50 = memref.load %arg0[%c0_37, %c7] : memref<2x8xi32, #tpu.memory_space<smem>>
    %51 = arith.index_cast %50 : i32 to index
    %c0_38 = arith.constant 0 : index
    %52 = vector.load %arg2[%51, %c0_38] : memref<176x128xf32, #tpu.memory_space<vmem>>, vector<1x64xf32>
    %c1_39 = arith.constant 1 : index
    %c7_40 = arith.constant 7 : index
    %53 = memref.load %arg0[%c1_39, %c7_40] : memref<2x8xi32, #tpu.memory_space<smem>>
    %54 = arith.index_cast %53 : i32 to index
    %c0_41 = arith.constant 0 : index
    %55 = vector.load %arg2[%54, %c0_41] : memref<176x128xf32, #tpu.memory_space<vmem>>, vector<1x64xf32>
    %56 = tpu.concatenate %52, %55 in 0 : vector<1x64xf32>, vector<1x64xf32> -> vector<2x64xf32>
    %c0_42 = arith.constant 0 : index
    %c0_43 = arith.constant 0 : index
    %57 = vector.load %arg2[%c0_42, %c0_43] : memref<176x128xf32, #tpu.memory_space<vmem>>, vector<1x64xf32>
    %c0_44 = arith.constant 0 : index
    %c0_45 = arith.constant 0 : index
    %58 = vector.load %arg2[%c0_44, %c0_45] : memref<176x128xf32, #tpu.memory_space<vmem>>, vector<1x64xf32>
    %59 = tpu.concatenate %57, %58 in 0 : vector<1x64xf32>, vector<1x64xf32> -> vector<2x64xf32>
    %c0_i32 = arith.constant 0 : i32
    %60 = vector.broadcast %c0_i32 : i32 to vector<1x32xi32>
    %c8_i32 = arith.constant 8 : i32
    %61 = vector.broadcast %c8_i32 : i32 to vector<1x32xi32>
    %62 = tpu.concatenate %60, %61 in 1 : vector<1x32xi32>, vector<1x32xi32> -> vector<1x64xi32>
    %63 = vector.broadcast %62 : vector<1x64xi32> to vector<2x64xi32>
    %64 = vector.broadcast %0 : vector<2x1xi32> to vector<2x64xi32>
    %65 = arith.cmpi slt, %63, %64 : vector<2x64xi32>
    %c1_i32 = arith.constant 1 : i32
    %66 = vector.broadcast %c1_i32 : i32 to vector<1x32xi32>
    %c0_i32_46 = arith.constant 0 : i32
    %67 = vector.broadcast %c0_i32_46 : i32 to vector<1x32xi32>
    %68 = tpu.concatenate %66, %67 in 1 : vector<1x32xi32>, vector<1x32xi32> -> vector<1x64xi32>
    %69 = vector.broadcast %68 : vector<1x64xi32> to vector<2x64xi32>
    %70 = vector.broadcast %0 : vector<2x1xi32> to vector<2x64xi32>
    %71 = arith.cmpi slt, %69, %70 : vector<2x64xi32>
    %c2_i32 = arith.constant 2 : i32
    %72 = vector.broadcast %c2_i32 : i32 to vector<1x32xi32>
    %c1_i32_47 = arith.constant 1 : i32
    %73 = vector.broadcast %c1_i32_47 : i32 to vector<1x32xi32>
    %74 = tpu.concatenate %72, %73 in 1 : vector<1x32xi32>, vector<1x32xi32> -> vector<1x64xi32>
    %75 = vector.broadcast %74 : vector<1x64xi32> to vector<2x64xi32>
    %76 = vector.broadcast %0 : vector<2x1xi32> to vector<2x64xi32>
    %77 = arith.cmpi slt, %75, %76 : vector<2x64xi32>
    %c3_i32 = arith.constant 3 : i32
    %78 = vector.broadcast %c3_i32 : i32 to vector<1x32xi32>
    %c2_i32_48 = arith.constant 2 : i32
    %79 = vector.broadcast %c2_i32_48 : i32 to vector<1x32xi32>
    %80 = tpu.concatenate %78, %79 in 1 : vector<1x32xi32>, vector<1x32xi32> -> vector<1x64xi32>
    %81 = vector.broadcast %80 : vector<1x64xi32> to vector<2x64xi32>
    %82 = vector.broadcast %0 : vector<2x1xi32> to vector<2x64xi32>
    %83 = arith.cmpi slt, %81, %82 : vector<2x64xi32>
    %c4_i32 = arith.constant 4 : i32
    %84 = vector.broadcast %c4_i32 : i32 to vector<1x32xi32>
    %c3_i32_49 = arith.constant 3 : i32
    %85 = vector.broadcast %c3_i32_49 : i32 to vector<1x32xi32>
    %86 = tpu.concatenate %84, %85 in 1 : vector<1x32xi32>, vector<1x32xi32> -> vector<1x64xi32>
    %87 = vector.broadcast %86 : vector<1x64xi32> to vector<2x64xi32>
    %88 = vector.broadcast %0 : vector<2x1xi32> to vector<2x64xi32>
    %89 = arith.cmpi slt, %87, %88 : vector<2x64xi32>
    %c5_i32 = arith.constant 5 : i32
    %90 = vector.broadcast %c5_i32 : i32 to vector<1x32xi32>
    %c4_i32_50 = arith.constant 4 : i32
    %91 = vector.broadcast %c4_i32_50 : i32 to vector<1x32xi32>
    %92 = tpu.concatenate %90, %91 in 1 : vector<1x32xi32>, vector<1x32xi32> -> vector<1x64xi32>
    %93 = vector.broadcast %92 : vector<1x64xi32> to vector<2x64xi32>
    %94 = vector.broadcast %0 : vector<2x1xi32> to vector<2x64xi32>
    %95 = arith.cmpi slt, %93, %94 : vector<2x64xi32>
    %c6_i32 = arith.constant 6 : i32
    %96 = vector.broadcast %c6_i32 : i32 to vector<1x32xi32>
    %c5_i32_51 = arith.constant 5 : i32
    %97 = vector.broadcast %c5_i32_51 : i32 to vector<1x32xi32>
    %98 = tpu.concatenate %96, %97 in 1 : vector<1x32xi32>, vector<1x32xi32> -> vector<1x64xi32>
    %99 = vector.broadcast %98 : vector<1x64xi32> to vector<2x64xi32>
    %100 = vector.broadcast %0 : vector<2x1xi32> to vector<2x64xi32>
    %101 = arith.cmpi slt, %99, %100 : vector<2x64xi32>
    %c7_i32 = arith.constant 7 : i32
    %102 = vector.broadcast %c7_i32 : i32 to vector<1x32xi32>
    %c6_i32_52 = arith.constant 6 : i32
    %103 = vector.broadcast %c6_i32_52 : i32 to vector<1x32xi32>
    %104 = tpu.concatenate %102, %103 in 1 : vector<1x32xi32>, vector<1x32xi32> -> vector<1x64xi32>
    %105 = vector.broadcast %104 : vector<1x64xi32> to vector<2x64xi32>
    %106 = vector.broadcast %0 : vector<2x1xi32> to vector<2x64xi32>
    %107 = arith.cmpi slt, %105, %106 : vector<2x64xi32>
    %c8_i32_53 = arith.constant 8 : i32
    %108 = vector.broadcast %c8_i32_53 : i32 to vector<1x32xi32>
    %c7_i32_54 = arith.constant 7 : i32
    %109 = vector.broadcast %c7_i32_54 : i32 to vector<1x32xi32>
    %110 = tpu.concatenate %108, %109 in 1 : vector<1x32xi32>, vector<1x32xi32> -> vector<1x64xi32>
    %111 = vector.broadcast %110 : vector<1x64xi32> to vector<2x64xi32>
    %112 = vector.broadcast %0 : vector<2x1xi32> to vector<2x64xi32>
    %113 = arith.cmpi slt, %111, %112 : vector<2x64xi32>
    %c32 = arith.constant 32 : index
    %c0_55 = arith.constant 0 : index
    %114 = vector.load %arg2[%c32, %c0_55] : memref<176x128xf32, #tpu.memory_space<vmem>>, vector<64x64xf32>
    %cst = arith.constant 0.000000e+00 : f32
    %115 = vector.broadcast %cst : f32 to vector<2x64xf32>
    %cst_56 = arith.constant dense<0.000000e+00> : vector<2x64xf32>
    %116 = tpu.matmul %115, %114, %cst_56 {dimension_numbers = #tpu.dot_dimension_numbers<[1], [0], [0], [1], [0, 0, 1, 1], [], []>} : vector<2x64xf32>, vector<64x64xf32>, vector<2x64xf32> -> vector<2x64xf32>
    %117 = arith.addf %116, %7 : vector<2x64xf32>
    %118 = math.tanh %117 : vector<2x64xf32>
    %119 = arith.select %65, %118, %115 : vector<2x64xi1>, vector<2x64xf32>
    %cst_57 = arith.constant dense<0.000000e+00> : vector<2x64xf32>
    %120 = tpu.matmul %119, %114, %cst_57 {dimension_numbers = #tpu.dot_dimension_numbers<[1], [0], [0], [1], [0, 0, 1, 1], [], []>} : vector<2x64xf32>, vector<64x64xf32>, vector<2x64xf32> -> vector<2x64xf32>
    %121 = arith.addf %120, %14 : vector<2x64xf32>
    %122 = math.tanh %121 : vector<2x64xf32>
    %123 = arith.select %71, %122, %119 : vector<2x64xi1>, vector<2x64xf32>
    %cst_58 = arith.constant dense<0.000000e+00> : vector<2x64xf32>
    %124 = tpu.matmul %123, %114, %cst_58 {dimension_numbers = #tpu.dot_dimension_numbers<[1], [0], [0], [1], [0, 0, 1, 1], [], []>} : vector<2x64xf32>, vector<64x64xf32>, vector<2x64xf32> -> vector<2x64xf32>
    %125 = arith.addf %124, %21 : vector<2x64xf32>
    %126 = math.tanh %125 : vector<2x64xf32>
    %127 = arith.select %77, %126, %123 : vector<2x64xi1>, vector<2x64xf32>
    %cst_59 = arith.constant dense<0.000000e+00> : vector<2x64xf32>
    %128 = tpu.matmul %127, %114, %cst_59 {dimension_numbers = #tpu.dot_dimension_numbers<[1], [0], [0], [1], [0, 0, 1, 1], [], []>} : vector<2x64xf32>, vector<64x64xf32>, vector<2x64xf32> -> vector<2x64xf32>
    %129 = arith.addf %128, %28 : vector<2x64xf32>
    %130 = math.tanh %129 : vector<2x64xf32>
    %131 = arith.select %83, %130, %127 : vector<2x64xi1>, vector<2x64xf32>
    %cst_60 = arith.constant dense<0.000000e+00> : vector<2x64xf32>
    %132 = tpu.matmul %131, %114, %cst_60 {dimension_numbers = #tpu.dot_dimension_numbers<[1], [0], [0], [1], [0, 0, 1, 1], [], []>} : vector<2x64xf32>, vector<64x64xf32>, vector<2x64xf32> -> vector<2x64xf32>
    %133 = arith.addf %132, %35 : vector<2x64xf32>
    %134 = math.tanh %133 : vector<2x64xf32>
    %135 = arith.select %89, %134, %131 : vector<2x64xi1>, vector<2x64xf32>
    %cst_61 = arith.constant dense<0.000000e+00> : vector<2x64xf32>
    %136 = tpu.matmul %135, %114, %cst_61 {dimension_numbers = #tpu.dot_dimension_numbers<[1], [0], [0], [1], [0, 0, 1, 1], [], []>} : vector<2x64xf32>, vector<64x64xf32>, vector<2x64xf32> -> vector<2x64xf32>
    %137 = arith.addf %136, %42 : vector<2x64xf32>
    %138 = math.tanh %137 : vector<2x64xf32>
    %139 = arith.select %95, %138, %135 : vector<2x64xi1>, vector<2x64xf32>
    %cst_62 = arith.constant dense<0.000000e+00> : vector<2x64xf32>
    %140 = tpu.matmul %139, %114, %cst_62 {dimension_numbers = #tpu.dot_dimension_numbers<[1], [0], [0], [1], [0, 0, 1, 1], [], []>} : vector<2x64xf32>, vector<64x64xf32>, vector<2x64xf32> -> vector<2x64xf32>
    %141 = arith.addf %140, %49 : vector<2x64xf32>
    %142 = math.tanh %141 : vector<2x64xf32>
    %143 = arith.select %101, %142, %139 : vector<2x64xi1>, vector<2x64xf32>
    %cst_63 = arith.constant dense<0.000000e+00> : vector<2x64xf32>
    %144 = tpu.matmul %143, %114, %cst_63 {dimension_numbers = #tpu.dot_dimension_numbers<[1], [0], [0], [1], [0, 0, 1, 1], [], []>} : vector<2x64xf32>, vector<64x64xf32>, vector<2x64xf32> -> vector<2x64xf32>
    %145 = arith.addf %144, %56 : vector<2x64xf32>
    %146 = math.tanh %145 : vector<2x64xf32>
    %147 = arith.select %107, %146, %143 : vector<2x64xi1>, vector<2x64xf32>
    %cst_64 = arith.constant dense<0.000000e+00> : vector<2x64xf32>
    %148 = tpu.matmul %147, %114, %cst_64 {dimension_numbers = #tpu.dot_dimension_numbers<[1], [0], [0], [1], [0, 0, 1, 1], [], []>} : vector<2x64xf32>, vector<64x64xf32>, vector<2x64xf32> -> vector<2x64xf32>
    %149 = arith.addf %148, %59 : vector<2x64xf32>
    %150 = math.tanh %149 : vector<2x64xf32>
    %151 = arith.select %113, %150, %147 : vector<2x64xi1>, vector<2x64xf32>
    %152 = vector.extract_strided_slice %151 {offsets = [0, 32], sizes = [2, 32], strides = [1, 1]} : vector<2x64xf32> to vector<2x32xf32>
    %c96 = arith.constant 96 : index
    %c0_65 = arith.constant 0 : index
    %153 = vector.load %arg2[%c96, %c0_65] : memref<176x128xf32, #tpu.memory_space<vmem>>, vector<32x32xf32>
    %c160 = arith.constant 160 : index
    %c0_66 = arith.constant 0 : index
    %154 = vector.load %arg2[%c160, %c0_66] : memref<176x128xf32, #tpu.memory_space<vmem>>, vector<1x32xf32>
    %cst_67 = arith.constant dense<0.000000e+00> : vector<2x32xf32>
    %155 = tpu.matmul %152, %153, %cst_67 {dimension_numbers = #tpu.dot_dimension_numbers<[1], [0], [0], [1], [0, 0, 1, 1], [], []>} : vector<2x32xf32>, vector<32x32xf32>, vector<2x32xf32> -> vector<2x32xf32>
    %156 = vector.broadcast %154 : vector<1x32xf32> to vector<2x32xf32>
    %157 = arith.addf %155, %156 : vector<2x32xf32>
    %cst_68 = arith.constant 0.000000e+00 : f32
    %158 = vector.broadcast %cst_68 : f32 to vector<2x32xf32>
    %159 = arith.maximumf %157, %158 : vector<2x32xf32>
    %c128 = arith.constant 128 : index
    %c0_69 = arith.constant 0 : index
    %160 = vector.load %arg2[%c128, %c0_69] : memref<176x128xf32, #tpu.memory_space<vmem>>, vector<32x128xf32>
    %c168 = arith.constant 168 : index
    %c0_70 = arith.constant 0 : index
    %161 = vector.load %arg2[%c168, %c0_70] : memref<176x128xf32, #tpu.memory_space<vmem>>, vector<1x128xf32>
    %cst_71 = arith.constant dense<0.000000e+00> : vector<2x128xf32>
    %162 = tpu.matmul %159, %160, %cst_71 {dimension_numbers = #tpu.dot_dimension_numbers<[1], [0], [0], [1], [0, 0, 1, 1], [], []>} : vector<2x32xf32>, vector<32x128xf32>, vector<2x128xf32> -> vector<2x128xf32>
    %163 = vector.broadcast %161 : vector<1x128xf32> to vector<2x128xf32>
    %164 = arith.addf %162, %163 : vector<2x128xf32>
    %c0_72 = arith.constant 0 : index
    %c0_73 = arith.constant 0 : index
    %165 = vector.load %arg3[%c0_72, %c0_73] : memref<2x128xf32, #tpu.memory_space<vmem>>, vector<2x128xf32>
    tpu.vector_store %arg3[%c0_72, %c0_73], %164 {strides = array<i32>} : memref<2x128xf32, #tpu.memory_space<vmem>>, vector<2x128xf32>,
    return
  }
}

</mosaic_0001>

<llo_original>
// kernel: tpu_custom_call.1
$region0: #{tpu_custom_call.1}
  #allocation0 [shape = 'u32[]', space=smem, size = 0x4, offset = 0x4, fixed_abs, tag = 'smem constant byte address 0x4 - core index']
  #allocation1 [shape = 'u32[144,128]{1,0:T(1,128)}', space=vmem, size = 0x12000, scoped, tag = 'internal scratch']
  %s0 = inlined_call_operand.vmem [shape: s32[2,8], index: 0, kind: input, shape index: {}]
  %s1 = inlined_call_operand.vmem [shape: s32[2,1], index: 1, kind: input, shape index: {}]
  %s2 = inlined_call_operand.hbm [shape: f32[176,128], index: 2, kind: input, shape index: {}]
  %s3 = inlined_call_operand.hbm [shape: f32[2,128], index: 3, kind: output, shape index: {}]
  %s4 = sld [smem:[#allocation0]]
  $region30: #{tpu_custom_call.1} parent=0
    _
  %s6 = ssub.s32 1, %s4
  %s7 = scalar_select 0, %s6, %s4
  $region1: #{tpu_custom_call.1} parent=0
    #allocation2 [shape = 'u8[1024]{0}', space=smem, size = 0x400, scoped, tag = 'input window, operand 0, single buffered']
    #allocation3 [shape = 's32[1]{0}', space=sflag, size = 0x4, scoped, tag = 'scoped memory for tpu_custom_call.1']
    #allocation4 [shape = 's32[1]{0}', space=sflag, size = 0x4, scoped, tag = 'scoped memory for tpu_custom_call.1']
    #allocation5 [shape = 's32[1]{0}', space=sflag, size = 0x4, scoped, tag = 'scoped memory for tpu_custom_call.1']
    #allocation6 [shape = 'u8[90112]{0}', space=vmem, size = 0x16000, scoped, tag = 'input window, operand 2, single buffered']
    #allocation7 [shape = 'u8[1024]{0}', space=vmem, size = 0x400, scoped, tag = 'output window, operand 0, single buffered']
    %8 = vsyncpa [#allocation5], 0
    %9 = vsyncpa [#allocation3], 0
    %10 = vsyncpa [#allocation4], 0
    // Predicated region
    $region2: #{tpu_custom_call.1} parent=1 // pred_check
      _
    $region3: #{tpu_custom_call.1} parent=1 // pred_check_branch
      %12 = sbr.rel (0) target = $region5
    $region4: #{tpu_custom_call.1} parent=1 // pred_region
      %s14 = ssub.s32 32, 32
      %15 = vsyncadd [#allocation5], %s14
      %s17 = sshll.u32 %s0, 4
      %s18 = int_to_ptr.vmem [resolvable:$true] %s17
      %20 = dma.vmem_to_smem %s18, 32, [#allocation2], [#allocation5]
    $region5: #{tpu_custom_call.1} parent=1 // pred_fallthru
      _
    // Predicated region
    $region6: #{tpu_custom_call.1} parent=1 // pred_check
      _
    $region7: #{tpu_custom_call.1} parent=1 // pred_check_branch
      %22 = sbr.rel (0) target = $region9
    $region8: #{tpu_custom_call.1} parent=1 // pred_region
      _
    $region9: #{tpu_custom_call.1} parent=1 // pred_fallthru
      _
    // Predicated region
    $region10: #{tpu_custom_call.1} parent=1 // pred_check
      _
    $region11: #{tpu_custom_call.1} parent=1 // pred_check_branch
      %24 = sbr.rel (0) target = $region13
    $region12: #{tpu_custom_call.1} parent=1 // pred_region
      %s26 = ssub.s32 2816, 2816
      %27 = vsyncadd [#allocation3], %s26
      %s28 = sshll.u32 [#allocation6], 4
      %s29 = int_to_ptr.vmem [resolvable:$true] %s28
      %34 = dma.hbm_to_vmem [thread:$0]  %s2, 2816, %s29, [#allocation3], 128, 128, 8
    $region13: #{tpu_custom_call.1} parent=1 // pred_fallthru
      _
    // Predicated region
    $region14: #{tpu_custom_call.1} parent=1 // pred_check
      _
    $region15: #{tpu_custom_call.1} parent=1 // pred_check_branch
      %36 = sbr.rel (0) target = $region17
    $region16: #{tpu_custom_call.1} parent=1 // pred_region
      %37 = dma.done [#allocation5], 32
    $region17: #{tpu_custom_call.1} parent=1 // pred_fallthru
      _
    // Predicated region
    $region18: #{tpu_custom_call.1} parent=1 // pred_check
      _
    $region19: #{tpu_custom_call.1} parent=1 // pred_check_branch
      %39 = sbr.rel (0) target = $region21
    $region20: #{tpu_custom_call.1} parent=1 // pred_region
      %40 = dma.done [#allocation3], 2816
    $region21: #{tpu_custom_call.1} parent=1 // pred_fallthru
      _
    %41 = sfence
    %v42 = vld [vmem:[%s1] sm:$0x3]
    %s43 = sld [smem:[#allocation2]]
    %s44 = scalar_lea.vmem [#allocation6], %s43
    %v45 = vld [vmem:[%s44] sm:$0x1]
    %s46 = sld [smem:[#allocation2 + $0x80]]
    %s47 = scalar_lea.vmem [#allocation6], %s46
    %v48 = vld [vmem:[%s47] sm:$0x1]
    %v50 = vrot.slane %v48, 7
    %vm52 = vcmask 1040384
    %v53 = vsel %vm52, %v45, %v50
    %s54 = sld [smem:[#allocation2 + $0x1]]
    %s55 = scalar_lea.vmem [#allocation6], %s54
    %v56 = vld [vmem:[%s55] sm:$0x1]
    %s57 = sld [smem:[#allocation2 + $0x81]]
    %s58 = scalar_lea.vmem [#allocation6], %s57
    %v59 = vld [vmem:[%s58] sm:$0x1]
    %v61 = vrot.slane %v59, 7
    %v63 = vsel %vm52, %v56, %v61
    %s64 = sld [smem:[#allocation2 + $0x2]]
    %s65 = scalar_lea.vmem [#allocation6], %s64
    %v66 = vld [vmem:[%s65] sm:$0x1]
    %s67 = sld [smem:[#allocation2 + $0x82]]
    %s68 = scalar_lea.vmem [#allocation6], %s67
    %v69 = vld [vmem:[%s68] sm:$0x1]
    %v71 = vrot.slane %v69, 7
    %v73 = vsel %vm52, %v66, %v71
    %s74 = sld [smem:[#allocation2 + $0x3]]
    %s75 = scalar_lea.vmem [#allocation6], %s74
    %v76 = vld [vmem:[%s75] sm:$0x1]
    %s77 = sld [smem:[#allocation2 + $0x83]]
    %s78 = scalar_lea.vmem [#allocation6], %s77
    %v79 = vld [vmem:[%s78] sm:$0x1]
    %v81 = vrot.slane %v79, 7
    %v83 = vsel %vm52, %v76, %v81
    %s84 = sld [smem:[#allocation2 + $0x4]]
    %s85 = scalar_lea.vmem [#allocation6], %s84
    %v86 = vld [vmem:[%s85] sm:$0x1]
    %s87 = sld [smem:[#allocation2 + $0x84]]
    %s88 = scalar_lea.vmem [#allocation6], %s87
    %v89 = vld [vmem:[%s88] sm:$0x1]
    %v91 = vrot.slane %v89, 7
    %v93 = vsel %vm52, %v86, %v91
    %s94 = sld [smem:[#allocation2 + $0x5]]
    %s95 = scalar_lea.vmem [#allocation6], %s94
    %v96 = vld [vmem:[%s95] sm:$0x1]
    %s97 = sld [smem:[#allocation2 + $0x85]]
    %s98 = scalar_lea.vmem [#allocation6], %s97
    %v99 = vld [vmem:[%s98] sm:$0x1]
    %v101 = vrot.slane %v99, 7
    %v103 = vsel %vm52, %v96, %v101
    %s104 = sld [smem:[#allocation2 + $0x6]]
    %s105 = scalar_lea.vmem [#allocation6], %s104
    %v106 = vld [vmem:[%s105] sm:$0x1]
    %s107 = sld [smem:[#allocation2 + $0x86]]
    %s108 = scalar_lea.vmem [#allocation6], %s107
    %v109 = vld [vmem:[%s108] sm:$0x1]
    %v111 = vrot.slane %v109, 7
    %v113 = vsel %vm52, %v106, %v111
    %s114 = sld [smem:[#allocation2 + $0x7]]
    %s115 = scalar_lea.vmem [#allocation6], %s114
    %v116 = vld [vmem:[%s115] sm:$0x1]
    %s117 = sld [smem:[#allocation2 + $0x87]]
    %s118 = scalar_lea.vmem [#allocation6], %s117
    %v119 = vld [vmem:[%s118] sm:$0x1]
    %v121 = vrot.slane %v119, 7
    %v123 = vsel %vm52, %v116, %v121
    %v124 = vld [vmem:[#allocation6] sm:$0x1]
    %v126 = vrot.slane %v124, 7
    %v128 = vsel %vm52, %v124, %v126
    %vm129 = vcmask 261120
    %v130 = vsel %vm129, 0, 8
    %v131 = vlaneseq
    %v132 = vshrl.u32 %v131, 7
    %v133 = vsub.s32 0, %v132
    %v134 = vrot.slane %v130, %v133
    %135 = vset.pattern.permute.xlu0 0
    %136 = vperm.xlu0 %135, %v42
    %v137 = vpop.permute.xlu0 %136
    %vm138 = vcmp.lt.s32.totalorder %v134, %v137
    %v139 = vsel %vm129, 1, 0
    %v140 = vlaneseq
    %v141 = vshrl.u32 %v140, 7
    %v142 = vsub.s32 0, %v141
    %v143 = vrot.slane %v139, %v142
    %vm144 = vcmp.lt.s32.totalorder %v143, %v137
    %v145 = vsel %vm129, 2, 1
    %v146 = vlaneseq
    %v147 = vshrl.u32 %v146, 7
    %v148 = vsub.s32 0, %v147
    %v149 = vrot.slane %v145, %v148
    %vm150 = vcmp.lt.s32.totalorder %v149, %v137
    %v151 = vsel %vm129, 3, 2
    %v152 = vlaneseq
    %v153 = vshrl.u32 %v152, 7
    %v154 = vsub.s32 0, %v153
    %v155 = vrot.slane %v151, %v154
    %vm156 = vcmp.lt.s32.totalorder %v155, %v137
    %v157 = vsel %vm129, 4, 3
    %v158 = vlaneseq
    %v159 = vshrl.u32 %v158, 7
    %v160 = vsub.s32 0, %v159
    %v161 = vrot.slane %v157, %v160
    %vm162 = vcmp.lt.s32.totalorder %v161, %v137
    %v163 = vsel %vm129, 5, 4
    %v164 = vlaneseq
    %v165 = vshrl.u32 %v164, 7
    %v166 = vsub.s32 0, %v165
    %v167 = vrot.slane %v163, %v166
    %vm168 = vcmp.lt.s32.totalorder %v167, %v137
    %v169 = vsel %vm129, 6, 5
    %v170 = vlaneseq
    %v171 = vshrl.u32 %v170, 7
    %v172 = vsub.s32 0, %v171
    %v173 = vrot.slane %v169, %v172
    %vm174 = vcmp.lt.s32.totalorder %v173, %v137
    %v175 = vsel %vm129, 7, 6
    %v176 = vlaneseq
    %v177 = vshrl.u32 %v176, 7
    %v178 = vsub.s32 0, %v177
    %v179 = vrot.slane %v175, %v178
    %vm180 = vcmp.lt.s32.totalorder %v179, %v137
    %v181 = vsel %vm129, 8, 7
    %v182 = vlaneseq
    %v183 = vshrl.u32 %v182, 7
    %v184 = vsub.s32 0, %v183
    %v185 = vrot.slane %v181, %v184
    %vm186 = vcmp.lt.s32.totalorder %v185, %v137
    %v187 = vld [vmem:[#allocation6 + $0x20] sm:$0xff]
    %v188 = vld [vmem:[#allocation6 + $0x28] sm:$0xff]
    %v189 = vld [vmem:[#allocation6 + $0x30] sm:$0xff]
    %v190 = vld [vmem:[#allocation6 + $0x38] sm:$0xff]
    %v191 = vld [vmem:[#allocation6 + $0x40] sm:$0xff]
    %v192 = vld [vmem:[#allocation6 + $0x48] sm:$0xff]
    %v193 = vld [vmem:[#allocation6 + $0x50] sm:$0xff]
    %v194 = vld [vmem:[#allocation6 + $0x58] sm:$0xff]
    %vm195 = vcmask 523264
    %v197 = vsel %vm195, 0.0, 0
    %199 = vmatprep.subr.mxu0 0.0
    %200 = vmatpush1.msra.mxu0 %v187
    %201 = vmatprep.subr.mxu0 0.0
    %202 = vmatpush1.msra.mxu0 %v188
    %203 = vmatprep.subr.mxu0 0.0
    %204 = vmatpush1.msra.mxu0 %v189
    %205 = vmatprep.subr.mxu0 0.0
    %206 = vmatpush1.msra.mxu0 %v190
    %207 = vmatprep.subr.mxu0 0.0
    %208 = vmatpush1.msra.mxu0 %v191
    %209 = vmatprep.subr.mxu0 0.0
    %210 = vmatpush1.msra.mxu0 %v192
    %211 = vmatprep.subr.mxu0 0.0
    %212 = vmatpush1.msra.mxu0 %v193
    %213 = vmatprep.subr.mxu0 0.0
    %214 = vmatpush1.msra.mxu0 %v194
    %215 = vmatprep.subr.mxu0 0.0
    %216 = vmatpush1.msra.mxu0 0.0
    %217 = vmatprep.subr.mxu0 0.0
    %218 = vmatpush1.msra.mxu0 0.0
    %219 = vmatprep.subr.mxu0 0.0
    %220 = vmatpush1.msra.mxu0 0.0
    %221 = vmatprep.subr.mxu0 0.0
    %222 = vmatpush1.msra.mxu0 0.0
    %223 = vmatprep.subr.mxu0 0.0
    %224 = vmatpush1.msra.mxu0 0.0
    %225 = vmatprep.subr.mxu0 0.0
    %226 = vmatpush1.msra.mxu0 0.0
    %227 = vmatprep.subr.mxu0 0.0
    %228 = vmatpush1.msra.mxu0 0.0
    %229 = vmatprep.subr.mxu0 0.0
    %230 = vmatpush1.msra.mxu0 0.0
    %231 = vmatprep.subr.mxu0 0.0
    %232 = vmatpush1.msra.mxu0 0.0
    %233 = vmatprep.subr.mxu0 0.0
    %234 = vmatpush1.msra.mxu0 0.0
    %235 = vmatprep.subr.mxu0 0.0
    %236 = vmatpush1.msra.mxu0 0.0
    %237 = vmatprep.subr.mxu0 0.0
    %238 = vmatpush1.msra.mxu0 0.0
    %239 = vmatprep.subr.mxu0 0.0
    %240 = vmatpush1.msra.mxu0 0.0
    %241 = vmatprep.subr.mxu0 0.0
    %242 = vmatpush1.msra.mxu0 0.0
    %243 = vmatprep.subr.mxu0 0.0
    %244 = vmatpush1.msra.mxu0 0.0
    %245 = vmatprep.subr.mxu0 0.0
    %246 = vmatpush1.msra.mxu0 0.0
    %247 = vmatprep.subr.mxu0 0.0
    %248 = vmatpush1.msra.mxu0 0.0
    %249 = vmatprep.subr.mxu0 0.0
    %250 = vmatpush1.msra.mxu0 0.0
    %251 = vmatprep.subr.mxu0 0.0
    %252 = vmatpush1.msra.mxu0 0.0
    %253 = vmatprep.subr.mxu0 0.0
    %254 = vmatpush1.msra.mxu0 0.0
    %255 = vmatprep.subr.mxu0 0.0
    %256 = vmatpush1.msra.mxu0 0.0
    %257 = vmatprep.subr.mxu0 0.0
    %258 = vmatpush1.msra.mxu0 0.0
    %259 = vmatprep.subr.mxu0 0.0
    %260 = vmatpush1.msra.mxu0 0.0
    %261 = vmatprep.subr.mxu0 0.0
    %262 = vmatpush1.msra.mxu0 0.0
    %263 = vmatprep.mubr.f32.mxu0 0.0
    %264 = vmatmul.mubr.f32.gmra.mrb[0].mxu0 %v197
    %v265 = vpop.f32.mrb[0].mxu0
    %v266 = vadd.f32 %v53, %v265
    %v267 = vpop.f32.mrb[0].mxu0
    %268 = vdwg.mxu0
    %v269 = vtanh.pop %v266
    %v270 = vsel %vm138, %v269, 0.0
    %v272 = vsel %vm195, %v270, 0
    %274 = vmatprep.subr.mxu0 0.0
    %275 = vmatpush1.msra.mxu0 %v187
    %276 = vmatprep.subr.mxu0 0.0
    %277 = vmatpush1.msra.mxu0 %v188
    %278 = vmatprep.subr.mxu0 0.0
    %279 = vmatpush1.msra.mxu0 %v189
    %280 = vmatprep.subr.mxu0 0.0
    %281 = vmatpush1.msra.mxu0 %v190
    %282 = vmatprep.subr.mxu0 0.0
    %283 = vmatpush1.msra.mxu0 %v191
    %284 = vmatprep.subr.mxu0 0.0
    %285 = vmatpush1.msra.mxu0 %v192
    %286 = vmatprep.subr.mxu0 0.0
    %287 = vmatpush1.msra.mxu0 %v193
    %288 = vmatprep.subr.mxu0 0.0
    %289 = vmatpush1.msra.mxu0 %v194
    %290 = vmatprep.subr.mxu0 0.0
    %291 = vmatpush1.msra.mxu0 0.0
    %292 = vmatprep.subr.mxu0 0.0
    %293 = vmatpush1.msra.mxu0 0.0
    %294 = vmatprep.subr.mxu0 0.0
    %295 = vmatpush1.msra.mxu0 0.0
    %296 = vmatprep.subr.mxu0 0.0
    %297 = vmatpush1.msra.mxu0 0.0
    %298 = vmatprep.subr.mxu0 0.0
    %299 = vmatpush1.msra.mxu0 0.0
    %300 = vmatprep.subr.mxu0 0.0
    %301 = vmatpush1.msra.mxu0 0.0
    %302 = vmatprep.subr.mxu0 0.0
    %303 = vmatpush1.msra.mxu0 0.0
    %304 = vmatprep.subr.mxu0 0.0
    %305 = vmatpush1.msra.mxu0 0.0
    %306 = vmatprep.subr.mxu0 0.0
    %307 = vmatpush1.msra.mxu0 0.0
    %308 = vmatprep.subr.mxu0 0.0
    %309 = vmatpush1.msra.mxu0 0.0
    %310 = vmatprep.subr.mxu0 0.0
    %311 = vmatpush1.msra.mxu0 0.0
    %312 = vmatprep.subr.mxu0 0.0
    %313 = vmatpush1.msra.mxu0 0.0
    %314 = vmatprep.subr.mxu0 0.0
    %315 = vmatpush1.msra.mxu0 0.0
    %316 = vmatprep.subr.mxu0 0.0
    %317 = vmatpush1.msra.mxu0 0.0
    %318 = vmatprep.subr.mxu0 0.0
    %319 = vmatpush1.msra.mxu0 0.0
    %320 = vmatprep.subr.mxu0 0.0
    %321 = vmatpush1.msra.mxu0 0.0
    %322 = vmatprep.subr.mxu0 0.0
    %323 = vmatpush1.msra.mxu0 0.0
    %324 = vmatprep.subr.mxu0 0.0
    %325 = vmatpush1.msra.mxu0 0.0
    %326 = vmatprep.subr.mxu0 0.0
    %327 = vmatpush1.msra.mxu0 0.0
    %328 = vmatprep.subr.mxu0 0.0
    %329 = vmatpush1.msra.mxu0 0.0
    %330 = vmatprep.subr.mxu0 0.0
    %331 = vmatpush1.msra.mxu0 0.0
    %332 = vmatprep.subr.mxu0 0.0
    %333 = vmatpush1.msra.mxu0 0.0
    %334 = vmatprep.subr.mxu0 0.0
    %335 = vmatpush1.msra.mxu0 0.0
    %336 = vmatprep.subr.mxu0 0.0
    %337 = vmatpush1.msra.mxu0 0.0
    %338 = vmatprep.mubr.f32.mxu0 0.0
    %339 = vmatmul.mubr.f32.gmra.mrb[0].mxu0 %v272
    %v340 = vpop.f32.mrb[0].mxu0
    %v341 = vadd.f32 %v63, %v340
    %v342 = vpop.f32.mrb[0].mxu0
    %343 = vdwg.mxu0
    %v344 = vtanh.pop %v341
    %v345 = vsel %vm144, %v344, %v270
    %v347 = vsel %vm195, %v345, 0
    %349 = vmatprep.subr.mxu0 0.0
    %350 = vmatpush1.msra.mxu0 %v187
    %351 = vmatprep.subr.mxu0 0.0
    %352 = vmatpush1.msra.mxu0 %v188
    %353 = vmatprep.subr.mxu0 0.0
    %354 = vmatpush1.msra.mxu0 %v189
    %355 = vmatprep.subr.mxu0 0.0
    %356 = vmatpush1.msra.mxu0 %v190
    %357 = vmatprep.subr.mxu0 0.0
    %358 = vmatpush1.msra.mxu0 %v191
    %359 = vmatprep.subr.mxu0 0.0
    %360 = vmatpush1.msra.mxu0 %v192
    %361 = vmatprep.subr.mxu0 0.0
    %362 = vmatpush1.msra.mxu0 %v193
    %363 = vmatprep.subr.mxu0 0.0
    %364 = vmatpush1.msra.mxu0 %v194
    %365 = vmatprep.subr.mxu0 0.0
    %366 = vmatpush1.msra.mxu0 0.0
    %367 = vmatprep.subr.mxu0 0.0
    %368 = vmatpush1.msra.mxu0 0.0
    %369 = vmatprep.subr.mxu0 0.0
    %370 = vmatpush1.msra.mxu0 0.0
    %371 = vmatprep.subr.mxu0 0.0
    %372 = vmatpush1.msra.mxu0 0.0
    %373 = vmatprep.subr.mxu0 0.0
    %374 = vmatpush1.msra.mxu0 0.0
    %375 = vmatprep.subr.mxu0 0.0
    %376 = vmatpush1.msra.mxu0 0.0
    %377 = vmatprep.subr.mxu0 0.0
    %378 = vmatpush1.msra.mxu0 0.0
    %379 = vmatprep.subr.mxu0 0.0
    %380 = vmatpush1.msra.mxu0 0.0
    %381 = vmatprep.subr.mxu0 0.0
    %382 = vmatpush1.msra.mxu0 0.0
    %383 = vmatprep.subr.mxu0 0.0
    %384 = vmatpush1.msra.mxu0 0.0
    %385 = vmatprep.subr.mxu0 0.0
    %386 = vmatpush1.msra.mxu0 0.0
    %387 = vmatprep.subr.mxu0 0.0
    %388 = vmatpush1.msra.mxu0 0.0
    %389 = vmatprep.subr.mxu0 0.0
    %390 = vmatpush1.msra.mxu0 0.0
    %391 = vmatprep.subr.mxu0 0.0
    %392 = vmatpush1.msra.mxu0 0.0
    %393 = vmatprep.subr.mxu0 0.0
    %394 = vmatpush1.msra.mxu0 0.0
    %395 = vmatprep.subr.mxu0 0.0
    %396 = vmatpush1.msra.mxu0 0.0
    %397 = vmatprep.subr.mxu0 0.0
    %398 = vmatpush1.msra.mxu0 0.0
    %399 = vmatprep.subr.mxu0 0.0
    %400 = vmatpush1.msra.mxu0 0.0
    %401 = vmatprep.subr.mxu0 0.0
    %402 = vmatpush1.msra.mxu0 0.0
    %403 = vmatprep.subr.mxu0 0.0
    %404 = vmatpush1.msra.mxu0 0.0
    %405 = vmatprep.subr.mxu0 0.0
    %406 = vmatpush1.msra.mxu0 0.0
    %407 = vmatprep.subr.mxu0 0.0
    %408 = vmatpush1.msra.mxu0 0.0
    %409 = vmatprep.subr.mxu0 0.0
    %410 = vmatpush1.msra.mxu0 0.0
    %411 = vmatprep.subr.mxu0 0.0
    %412 = vmatpush1.msra.mxu0 0.0
    %413 = vmatprep.mubr.f32.mxu0 0.0
    %414 = vmatmul.mubr.f32.gmra.mrb[0].mxu0 %v347
    %v415 = vpop.f32.mrb[0].mxu0
    %v416 = vadd.f32 %v73, %v415
    %v417 = vpop.f32.mrb[0].mxu0
    %418 = vdwg.mxu0
    %v419 = vtanh.pop %v416
    %v420 = vsel %vm150, %v419, %v345
    %v422 = vsel %vm195, %v420, 0
    %424 = vmatprep.subr.mxu0 0.0
    %425 = vmatpush1.msra.mxu0 %v187
    %426 = vmatprep.subr.mxu0 0.0
    %427 = vmatpush1.msra.mxu0 %v188
    %428 = vmatprep.subr.mxu0 0.0
    %429 = vmatpush1.msra.mxu0 %v189
    %430 = vmatprep.subr.mxu0 0.0
    %431 = vmatpush1.msra.mxu0 %v190
    %432 = vmatprep.subr.mxu0 0.0
    %433 = vmatpush1.msra.mxu0 %v191
    %434 = vmatprep.subr.mxu0 0.0
    %435 = vmatpush1.msra.mxu0 %v192
    %436 = vmatprep.subr.mxu0 0.0
    %437 = vmatpush1.msra.mxu0 %v193
    %438 = vmatprep.subr.mxu0 0.0
    %439 = vmatpush1.msra.mxu0 %v194
    %440 = vmatprep.subr.mxu0 0.0
    %441 = vmatpush1.msra.mxu0 0.0
    %442 = vmatprep.subr.mxu0 0.0
    %443 = vmatpush1.msra.mxu0 0.0
    %444 = vmatprep.subr.mxu0 0.0
    %445 = vmatpush1.msra.mxu0 0.0
    %446 = vmatprep.subr.mxu0 0.0
    %447 = vmatpush1.msra.mxu0 0.0
    %448 = vmatprep.subr.mxu0 0.0
    %449 = vmatpush1.msra.mxu0 0.0
    %450 = vmatprep.subr.mxu0 0.0
    %451 = vmatpush1.msra.mxu0 0.0
    %452 = vmatprep.subr.mxu0 0.0
    %453 = vmatpush1.msra.mxu0 0.0
    %454 = vmatprep.subr.mxu0 0.0
    %455 = vmatpush1.msra.mxu0 0.0
    %456 = vmatprep.subr.mxu0 0.0
    %457 = vmatpush1.msra.mxu0 0.0
    %458 = vmatprep.subr.mxu0 0.0
    %459 = vmatpush1.msra.mxu0 0.0
    %460 = vmatprep.subr.mxu0 0.0
    %461 = vmatpush1.msra.mxu0 0.0
    %462 = vmatprep.subr.mxu0 0.0
    %463 = vmatpush1.msra.mxu0 0.0
    %464 = vmatprep.subr.mxu0 0.0
    %465 = vmatpush1.msra.mxu0 0.0
    %466 = vmatprep.subr.mxu0 0.0
    %467 = vmatpush1.msra.mxu0 0.0
    %468 = vmatprep.subr.mxu0 0.0
    %469 = vmatpush1.msra.mxu0 0.0
    %470 = vmatprep.subr.mxu0 0.0
    %471 = vmatpush1.msra.mxu0 0.0
    %472 = vmatprep.subr.mxu0 0.0
    %473 = vmatpush1.msra.mxu0 0.0
    %474 = vmatprep.subr.mxu0 0.0
    %475 = vmatpush1.msra.mxu0 0.0
    %476 = vmatprep.subr.mxu0 0.0
    %477 = vmatpush1.msra.mxu0 0.0
    %478 = vmatprep.subr.mxu0 0.0
    %479 = vmatpush1.msra.mxu0 0.0
    %480 = vmatprep.subr.mxu0 0.0
    %481 = vmatpush1.msra.mxu0 0.0
    %482 = vmatprep.subr.mxu0 0.0
    %483 = vmatpush1.msra.mxu0 0.0
    %484 = vmatprep.subr.mxu0 0.0
    %485 = vmatpush1.msra.mxu0 0.0
    %486 = vmatprep.subr.mxu0 0.0
    %487 = vmatpush1.msra.mxu0 0.0
    %488 = vmatprep.mubr.f32.mxu0 0.0
    %489 = vmatmul.mubr.f32.gmra.mrb[0].mxu0 %v422
    %v490 = vpop.f32.mrb[0].mxu0
    %v491 = vadd.f32 %v83, %v490
    %v492 = vpop.f32.mrb[0].mxu0
    %493 = vdwg.mxu0
    %v494 = vtanh.pop %v491
    %v495 = vsel %vm156, %v494, %v420
    %v497 = vsel %vm195, %v495, 0
    %499 = vmatprep.subr.mxu0 0.0
    %500 = vmatpush1.msra.mxu0 %v187
    %501 = vmatprep.subr.mxu0 0.0
    %502 = vmatpush1.msra.mxu0 %v188
    %503 = vmatprep.subr.mxu0 0.0
    %504 = vmatpush1.msra.mxu0 %v189
    %505 = vmatprep.subr.mxu0 0.0
    %506 = vmatpush1.msra.mxu0 %v190
    %507 = vmatprep.subr.mxu0 0.0
    %508 = vmatpush1.msra.mxu0 %v191
    %509 = vmatprep.subr.mxu0 0.0
    %510 = vmatpush1.msra.mxu0 %v192
    %511 = vmatprep.subr.mxu0 0.0
    %512 = vmatpush1.msra.mxu0 %v193
    %513 = vmatprep.subr.mxu0 0.0
    %514 = vmatpush1.msra.mxu0 %v194
    %515 = vmatprep.subr.mxu0 0.0
    %516 = vmatpush1.msra.mxu0 0.0
    %517 = vmatprep.subr.mxu0 0.0
    %518 = vmatpush1.msra.mxu0 0.0
    %519 = vmatprep.subr.mxu0 0.0
    %520 = vmatpush1.msra.mxu0 0.0
    %521 = vmatprep.subr.mxu0 0.0
    %522 = vmatpush1.msra.mxu0 0.0
    %523 = vmatprep.subr.mxu0 0.0
    %524 = vmatpush1.msra.mxu0 0.0
    %525 = vmatprep.subr.mxu0 0.0
    %526 = vmatpush1.msra.mxu0 0.0
    %527 = vmatprep.subr.mxu0 0.0
    %528 = vmatpush1.msra.mxu0 0.0
    %529 = vmatprep.subr.mxu0 0.0
    %530 = vmatpush1.msra.mxu0 0.0
    %531 = vmatprep.subr.mxu0 0.0
    %532 = vmatpush1.msra.mxu0 0.0
    %533 = vmatprep.subr.mxu0 0.0
    %534 = vmatpush1.msra.mxu0 0.0
    %535 = vmatprep.subr.mxu0 0.0
    %536 = vmatpush1.msra.mxu0 0.0
    %537 = vmatprep.subr.mxu0 0.0
    %538 = vmatpush1.msra.mxu0 0.0
    %539 = vmatprep.subr.mxu0 0.0
    %540 = vmatpush1.msra.mxu0 0.0
    %541 = vmatprep.subr.mxu0 0.0
    %542 = vmatpush1.msra.mxu0 0.0
    %543 = vmatprep.subr.mxu0 0.0
    %544 = vmatpush1.msra.mxu0 0.0
    %545 = vmatprep.subr.mxu0 0.0
    %546 = vmatpush1.msra.mxu0 0.0
    %547 = vmatprep.subr.mxu0 0.0
    %548 = vmatpush1.msra.mxu0 0.0
    %549 = vmatprep.subr.mxu0 0.0
    %550 = vmatpush1.msra.mxu0 0.0
    %551 = vmatprep.subr.mxu0 0.0
    %552 = vmatpush1.msra.mxu0 0.0
    %553 = vmatprep.subr.mxu0 0.0
    %554 = vmatpush1.msra.mxu0 0.0
    %555 = vmatprep.subr.mxu0 0.0
    %556 = vmatpush1.msra.mxu0 0.0
    %557 = vmatprep.subr.mxu0 0.0
    %558 = vmatpush1.msra.mxu0 0.0
    %559 = vmatprep.subr.mxu0 0.0
    %560 = vmatpush1.msra.mxu0 0.0
    %561 = vmatprep.subr.mxu0 0.0
    %562 = vmatpush1.msra.mxu0 0.0
    %563 = vmatprep.mubr.f32.mxu0 0.0
    %564 = vmatmul.mubr.f32.gmra.mrb[0].mxu0 %v497
    %v565 = vpop.f32.mrb[0].mxu0
    %v566 = vadd.f32 %v93, %v565
    %v567 = vpop.f32.mrb[0].mxu0
    %568 = vdwg.mxu0
    %v569 = vtanh.pop %v566
    %v570 = vsel %vm162, %v569, %v495
    %v572 = vsel %vm195, %v570, 0
    %574 = vmatprep.subr.mxu0 0.0
    %575 = vmatpush1.msra.mxu0 %v187
    %576 = vmatprep.subr.mxu0 0.0
    %577 = vmatpush1.msra.mxu0 %v188
    %578 = vmatprep.subr.mxu0 0.0
    %579 = vmatpush1.msra.mxu0 %v189
    %580 = vmatprep.subr.mxu0 0.0
    %581 = vmatpush1.msra.mxu0 %v190
    %582 = vmatprep.subr.mxu0 0.0
    %583 = vmatpush1.msra.mxu0 %v191
    %584 = vmatprep.subr.mxu0 0.0
    %585 = vmatpush1.msra.mxu0 %v192
    %586 = vmatprep.subr.mxu0 0.0
    %587 = vmatpush1.msra.mxu0 %v193
    %588 = vmatprep.subr.mxu0 0.0
    %589 = vmatpush1.msra.mxu0 %v194
    %590 = vmatprep.subr.mxu0 0.0
    %591 = vmatpush1.msra.mxu0 0.0
    %592 = vmatprep.subr.mxu0 0.0
    %593 = vmatpush1.msra.mxu0 0.0
    %594 = vmatprep.subr.mxu0 0.0
    %595 = vmatpush1.msra.mxu0 0.0
    %596 = vmatprep.subr.mxu0 0.0
    %597 = vmatpush1.msra.mxu0 0.0
    %598 = vmatprep.subr.mxu0 0.0
    %599 = vmatpush1.msra.mxu0 0.0
    %600 = vmatprep.subr.mxu0 0.0
    %601 = vmatpush1.msra.mxu0 0.0
    %602 = vmatprep.subr.mxu0 0.0
    %603 = vmatpush1.msra.mxu0 0.0
    %604 = vmatprep.subr.mxu0 0.0
    %605 = vmatpush1.msra.mxu0 0.0
    %606 = vmatprep.subr.mxu0 0.0
    %607 = vmatpush1.msra.mxu0 0.0
    %608 = vmatprep.subr.mxu0 0.0
    %609 = vmatpush1.msra.mxu0 0.0
    %610 = vmatprep.subr.mxu0 0.0
    %611 = vmatpush1.msra.mxu0 0.0
    %612 = vmatprep.subr.mxu0 0.0
    %613 = vmatpush1.msra.mxu0 0.0
    %614 = vmatprep.subr.mxu0 0.0
    %615 = vmatpush1.msra.mxu0 0.0
    %616 = vmatprep.subr.mxu0 0.0
    %617 = vmatpush1.msra.mxu0 0.0
    %618 = vmatprep.subr.mxu0 0.0
    %619 = vmatpush1.msra.mxu0 0.0
    %620 = vmatprep.subr.mxu0 0.0
    %621 = vmatpush1.msra.mxu0 0.0
    %622 = vmatprep.subr.mxu0 0.0
    %623 = vmatpush1.msra.mxu0 0.0
    %624 = vmatprep.subr.mxu0 0.0
    %625 = vmatpush1.msra.mxu0 0.0
    %626 = vmatprep.subr.mxu0 0.0
    %627 = vmatpush1.msra.mxu0 0.0
    %628 = vmatprep.subr.mxu0 0.0
    %629 = vmatpush1.msra.mxu0 0.0
    %630 = vmatprep.subr.mxu0 0.0
    %631 = vmatpush1.msra.mxu0 0.0
    %632 = vmatprep.subr.mxu0 0.0
    %633 = vmatpush1.msra.mxu0 0.0
    %634 = vmatprep.subr.mxu0 0.0
    %635 = vmatpush1.msra.mxu0 0.0
    %636 = vmatprep.subr.mxu0 0.0
    %637 = vmatpush1.msra.mxu0 0.0
    %638 = vmatprep.mubr.f32.mxu0 0.0
    %639 = vmatmul.mubr.f32.gmra.mrb[0].mxu0 %v572
    %v640 = vpop.f32.mrb[0].mxu0
    %v641 = vadd.f32 %v103, %v640
    %v642 = vpop.f32.mrb[0].mxu0
    %643 = vdwg.mxu0
    %v644 = vtanh.pop %v641
    %v645 = vsel %vm168, %v644, %v570
    %v647 = vsel %vm195, %v645, 0
    %649 = vmatprep.subr.mxu0 0.0
    %650 = vmatpush1.msra.mxu0 %v187
    %651 = vmatprep.subr.mxu0 0.0
    %652 = vmatpush1.msra.mxu0 %v188
    %653 = vmatprep.subr.mxu0 0.0
    %654 = vmatpush1.msra.mxu0 %v189
    %655 = vmatprep.subr.mxu0 0.0
    %656 = vmatpush1.msra.mxu0 %v190
    %657 = vmatprep.subr.mxu0 0.0
    %658 = vmatpush1.msra.mxu0 %v191
    %659 = vmatprep.subr.mxu0 0.0
    %660 = vmatpush1.msra.mxu0 %v192
    %661 = vmatprep.subr.mxu0 0.0
    %662 = vmatpush1.msra.mxu0 %v193
    %663 = vmatprep.subr.mxu0 0.0
    %664 = vmatpush1.msra.mxu0 %v194
    %665 = vmatprep.subr.mxu0 0.0
    %666 = vmatpush1.msra.mxu0 0.0
    %667 = vmatprep.subr.mxu0 0.0
    %668 = vmatpush1.msra.mxu0 0.0
    %669 = vmatprep.subr.mxu0 0.0
    %670 = vmatpush1.msra.mxu0 0.0
    %671 = vmatprep.subr.mxu0 0.0
    %672 = vmatpush1.msra.mxu0 0.0
    %673 = vmatprep.subr.mxu0 0.0
    %674 = vmatpush1.msra.mxu0 0.0
    %675 = vmatprep.subr.mxu0 0.0
    %676 = vmatpush1.msra.mxu0 0.0
    %677 = vmatprep.subr.mxu0 0.0
    %678 = vmatpush1.msra.mxu0 0.0
    %679 = vmatprep.subr.mxu0 0.0
    %680 = vmatpush1.msra.mxu0 0.0
    %681 = vmatprep.subr.mxu0 0.0
    %682 = vmatpush1.msra.mxu0 0.0
    %683 = vmatprep.subr.mxu0 0.0
    %684 = vmatpush1.msra.mxu0 0.0
    %685 = vmatprep.subr.mxu0 0.0
    %686 = vmatpush1.msra.mxu0 0.0
    %687 = vmatprep.subr.mxu0 0.0
    %688 = vmatpush1.msra.mxu0 0.0
    %689 = vmatprep.subr.mxu0 0.0
    %690 = vmatpush1.msra.mxu0 0.0
    %691 = vmatprep.subr.mxu0 0.0
    %692 = vmatpush1.msra.mxu0 0.0
    %693 = vmatprep.subr.mxu0 0.0
    %694 = vmatpush1.msra.mxu0 0.0
    %695 = vmatprep.subr.mxu0 0.0
    %696 = vmatpush1.msra.mxu0 0.0
    %697 = vmatprep.subr.mxu0 0.0
    %698 = vmatpush1.msra.mxu0 0.0
    %699 = vmatprep.subr.mxu0 0.0
    %700 = vmatpush1.msra.mxu0 0.0
    %701 = vmatprep.subr.mxu0 0.0
    %702 = vmatpush1.msra.mxu0 0.0
    %703 = vmatprep.subr.mxu0 0.0
    %704 = vmatpush1.msra.mxu0 0.0
    %705 = vmatprep.subr.mxu0 0.0
    %706 = vmatpush1.msra.mxu0 0.0
    %707 = vmatprep.subr.mxu0 0.0
    %708 = vmatpush1.msra.mxu0 0.0
    %709 = vmatprep.subr.mxu0 0.0
    %710 = vmatpush1.msra.mxu0 0.0
    %711 = vmatprep.subr.mxu0 0.0
    %712 = vmatpush1.msra.mxu0 0.0
    %713 = vmatprep.mubr.f32.mxu0 0.0
    %714 = vmatmul.mubr.f32.gmra.mrb[0].mxu0 %v647
    %v715 = vpop.f32.mrb[0].mxu0
    %v716 = vadd.f32 %v113, %v715
    %v717 = vpop.f32.mrb[0].mxu0
    %718 = vdwg.mxu0
    %v719 = vtanh.pop %v716
    %v720 = vsel %vm174, %v719, %v645
    %v722 = vsel %vm195, %v720, 0
    %724 = vmatprep.subr.mxu0 0.0
    %725 = vmatpush1.msra.mxu0 %v187
    %726 = vmatprep.subr.mxu0 0.0
    %727 = vmatpush1.msra.mxu0 %v188
    %728 = vmatprep.subr.mxu0 0.0
    %729 = vmatpush1.msra.mxu0 %v189
    %730 = vmatprep.subr.mxu0 0.0
    %731 = vmatpush1.msra.mxu0 %v190
    %732 = vmatprep.subr.mxu0 0.0
    %733 = vmatpush1.msra.mxu0 %v191
    %734 = vmatprep.subr.mxu0 0.0
    %735 = vmatpush1.msra.mxu0 %v192
    %736 = vmatprep.subr.mxu0 0.0
    %737 = vmatpush1.msra.mxu0 %v193
    %738 = vmatprep.subr.mxu0 0.0
    %739 = vmatpush1.msra.mxu0 %v194
    %740 = vmatprep.subr.mxu0 0.0
    %741 = vmatpush1.msra.mxu0 0.0
    %742 = vmatprep.subr.mxu0 0.0
    %743 = vmatpush1.msra.mxu0 0.0
    %744 = vmatprep.subr.mxu0 0.0
    %745 = vmatpush1.msra.mxu0 0.0
    %746 = vmatprep.subr.mxu0 0.0
    %747 = vmatpush1.msra.mxu0 0.0
    %748 = vmatprep.subr.mxu0 0.0
    %749 = vmatpush1.msra.mxu0 0.0
    %750 = vmatprep.subr.mxu0 0.0
    %751 = vmatpush1.msra.mxu0 0.0
    %752 = vmatprep.subr.mxu0 0.0
    %753 = vmatpush1.msra.mxu0 0.0
    %754 = vmatprep.subr.mxu0 0.0
    %755 = vmatpush1.msra.mxu0 0.0
    %756 = vmatprep.subr.mxu0 0.0
    %757 = vmatpush1.msra.mxu0 0.0
    %758 = vmatprep.subr.mxu0 0.0
    %759 = vmatpush1.msra.mxu0 0.0
    %760 = vmatprep.subr.mxu0 0.0
    %761 = vmatpush1.msra.mxu0 0.0
    %762 = vmatprep.subr.mxu0 0.0
    %763 = vmatpush1.msra.mxu0 0.0
    %764 = vmatprep.subr.mxu0 0.0
    %765 = vmatpush1.msra.mxu0 0.0
    %766 = vmatprep.subr.mxu0 0.0
    %767 = vmatpush1.msra.mxu0 0.0
    %768 = vmatprep.subr.mxu0 0.0
    %769 = vmatpush1.msra.mxu0 0.0
    %770 = vmatprep.subr.mxu0 0.0
    %771 = vmatpush1.msra.mxu0 0.0
    %772 = vmatprep.subr.mxu0 0.0
    %773 = vmatpush1.msra.mxu0 0.0
    %774 = vmatprep.subr.mxu0 0.0
    %775 = vmatpush1.msra.mxu0 0.0
    %776 = vmatprep.subr.mxu0 0.0
    %777 = vmatpush1.msra.mxu0 0.0
    %778 = vmatprep.subr.mxu0 0.0
    %779 = vmatpush1.msra.mxu0 0.0
    %780 = vmatprep.subr.mxu0 0.0
    %781 = vmatpush1.msra.mxu0 0.0
    %782 = vmatprep.subr.mxu0 0.0
    %783 = vmatpush1.msra.mxu0 0.0
    %784 = vmatprep.subr.mxu0 0.0
    %785 = vmatpush1.msra.mxu0 0.0
    %786 = vmatprep.subr.mxu0 0.0
    %787 = vmatpush1.msra.mxu0 0.0
    %788 = vmatprep.mubr.f32.mxu0 0.0
    %789 = vmatmul.mubr.f32.gmra.mrb[0].mxu0 %v722
    %v790 = vpop.f32.mrb[0].mxu0
    %v791 = vadd.f32 %v123, %v790
    %v792 = vpop.f32.mrb[0].mxu0
    %793 = vdwg.mxu0
    %v794 = vtanh.pop %v791
    %v795 = vsel %vm180, %v794, %v720
    %v797 = vsel %vm195, %v795, 0
    %799 = vmatprep.subr.mxu0 0.0
    %800 = vmatpush1.msra.mxu0 %v187
    %801 = vmatprep.subr.mxu0 0.0
    %802 = vmatpush1.msra.mxu0 %v188
    %803 = vmatprep.subr.mxu0 0.0
    %804 = vmatpush1.msra.mxu0 %v189
    %805 = vmatprep.subr.mxu0 0.0
    %806 = vmatpush1.msra.mxu0 %v190
    %807 = vmatprep.subr.mxu0 0.0
    %808 = vmatpush1.msra.mxu0 %v191
    %809 = vmatprep.subr.mxu0 0.0
    %810 = vmatpush1.msra.mxu0 %v192
    %811 = vmatprep.subr.mxu0 0.0
    %812 = vmatpush1.msra.mxu0 %v193
    %813 = vmatprep.subr.mxu0 0.0
    %814 = vmatpush1.msra.mxu0 %v194
    %815 = vmatprep.subr.mxu0 0.0
    %816 = vmatpush1.msra.mxu0 0.0
    %817 = vmatprep.subr.mxu0 0.0
    %818 = vmatpush1.msra.mxu0 0.0
    %819 = vmatprep.subr.mxu0 0.0
    %820 = vmatpush1.msra.mxu0 0.0
    %821 = vmatprep.subr.mxu0 0.0
    %822 = vmatpush1.msra.mxu0 0.0
    %823 = vmatprep.subr.mxu0 0.0
    %824 = vmatpush1.msra.mxu0 0.0
    %825 = vmatprep.subr.mxu0 0.0
    %826 = vmatpush1.msra.mxu0 0.0
    %827 = vmatprep.subr.mxu0 0.0
    %828 = vmatpush1.msra.mxu0 0.0
    %829 = vmatprep.subr.mxu0 0.0
    %830 = vmatpush1.msra.mxu0 0.0
    %831 = vmatprep.subr.mxu0 0.0
    %832 = vmatpush1.msra.mxu0 0.0
    %833 = vmatprep.subr.mxu0 0.0
    %834 = vmatpush1.msra.mxu0 0.0
    %835 = vmatprep.subr.mxu0 0.0
    %836 = vmatpush1.msra.mxu0 0.0
    %837 = vmatprep.subr.mxu0 0.0
    %838 = vmatpush1.msra.mxu0 0.0
    %839 = vmatprep.subr.mxu0 0.0
    %840 = vmatpush1.msra.mxu0 0.0
    %841 = vmatprep.subr.mxu0 0.0
    %842 = vmatpush1.msra.mxu0 0.0
    %843 = vmatprep.subr.mxu0 0.0
    %844 = vmatpush1.msra.mxu0 0.0
    %845 = vmatprep.subr.mxu0 0.0
    %846 = vmatpush1.msra.mxu0 0.0
    %847 = vmatprep.subr.mxu0 0.0
    %848 = vmatpush1.msra.mxu0 0.0
    %849 = vmatprep.subr.mxu0 0.0
    %850 = vmatpush1.msra.mxu0 0.0
    %851 = vmatprep.subr.mxu0 0.0
    %852 = vmatpush1.msra.mxu0 0.0
    %853 = vmatprep.subr.mxu0 0.0
    %854 = vmatpush1.msra.mxu0 0.0
    %855 = vmatprep.subr.mxu0 0.0
    %856 = vmatpush1.msra.mxu0 0.0
    %857 = vmatprep.subr.mxu0 0.0
    %858 = vmatpush1.msra.mxu0 0.0
    %859 = vmatprep.subr.mxu0 0.0
    %860 = vmatpush1.msra.mxu0 0.0
    %861 = vmatprep.subr.mxu0 0.0
    %862 = vmatpush1.msra.mxu0 0.0
    %863 = vmatprep.mubr.f32.mxu0 0.0
    %864 = vmatmul.mubr.f32.gmra.mrb[0].mxu0 %v797
    %v865 = vpop.f32.mrb[0].mxu0
    %v866 = vadd.f32 %v128, %v865
    %v867 = vpop.f32.mrb[0].mxu0
    %868 = vdwg.mxu0
    %v869 = vtanh.pop %v866
    %v870 = vsel %vm186, %v869, %v795
    %v871 = vld [vmem:[#allocation6 + $0x60] sm:$0xff]
    %v872 = vld [vmem:[#allocation6 + $0x68] sm:$0xff]
    %v873 = vld [vmem:[#allocation6 + $0x70] sm:$0xff]
    %v874 = vld [vmem:[#allocation6 + $0x78] sm:$0xff]
    %v875 = vld [vmem:[#allocation6 + $0xa0] sm:$0x1]
    %v876 = vlaneseq
    %v877 = vshrl.u32 %v876, 7
    %v878 = vsub.s32 0, %v877
    %v879 = vrot.slane %v875, %v878
    %881 = vrot.lane.b32.xlu0 %v870, 96
    %v882 = vpop.permute.xlu0 %881
    %v883 = vsel %vm129, %v882, 0
    %885 = vmatprep.subr.mxu0 0.0
    %886 = vmatpush1.msra.mxu0 %v871
    %887 = vmatprep.subr.mxu0 0.0
    %888 = vmatpush1.msra.mxu0 %v872
    %889 = vmatprep.subr.mxu0 0.0
    %890 = vmatpush1.msra.mxu0 %v873
    %891 = vmatprep.subr.mxu0 0.0
    %892 = vmatpush1.msra.mxu0 %v874
    %893 = vmatprep.subr.mxu0 0.0
    %894 = vmatpush1.msra.mxu0 0.0
    %895 = vmatprep.subr.mxu0 0.0
    %896 = vmatpush1.msra.mxu0 0.0
    %897 = vmatprep.subr.mxu0 0.0
    %898 = vmatpush1.msra.mxu0 0.0
    %899 = vmatprep.subr.mxu0 0.0
    %900 = vmatpush1.msra.mxu0 0.0
    %901 = vmatprep.subr.mxu0 0.0
    %902 = vmatpush1.msra.mxu0 0.0
    %903 = vmatprep.subr.mxu0 0.0
    %904 = vmatpush1.msra.mxu0 0.0
    %905 = vmatprep.subr.mxu0 0.0
    %906 = vmatpush1.msra.mxu0 0.0
    %907 = vmatprep.subr.mxu0 0.0
    %908 = vmatpush1.msra.mxu0 0.0
    %909 = vmatprep.subr.mxu0 0.0
    %910 = vmatpush1.msra.mxu0 0.0
    %911 = vmatprep.subr.mxu0 0.0
    %912 = vmatpush1.msra.mxu0 0.0
    %913 = vmatprep.subr.mxu0 0.0
    %914 = vmatpush1.msra.mxu0 0.0
    %915 = vmatprep.subr.mxu0 0.0
    %916 = vmatpush1.msra.mxu0 0.0
    %917 = vmatprep.subr.mxu0 0.0
    %918 = vmatpush1.msra.mxu0 0.0
    %919 = vmatprep.subr.mxu0 0.0
    %920 = vmatpush1.msra.mxu0 0.0
    %921 = vmatprep.subr.mxu0 0.0
    %922 = vmatpush1.msra.mxu0 0.0
    %923 = vmatprep.subr.mxu0 0.0
    %924 = vmatpush1.msra.mxu0 0.0
    %925 = vmatprep.subr.mxu0 0.0
    %926 = vmatpush1.msra.mxu0 0.0
    %927 = vmatprep.subr.mxu0 0.0
    %928 = vmatpush1.msra.mxu0 0.0
    %929 = vmatprep.subr.mxu0 0.0
    %930 = vmatpush1.msra.mxu0 0.0
    %931 = vmatprep.subr.mxu0 0.0
    %932 = vmatpush1.msra.mxu0 0.0
    %933 = vmatprep.subr.mxu0 0.0
    %934 = vmatpush1.msra.mxu0 0.0
    %935 = vmatprep.subr.mxu0 0.0
    %936 = vmatpush1.msra.mxu0 0.0
    %937 = vmatprep.subr.mxu0 0.0
    %938 = vmatpush1.msra.mxu0 0.0
    %939 = vmatprep.subr.mxu0 0.0
    %940 = vmatpush1.msra.mxu0 0.0
    %941 = vmatprep.subr.mxu0 0.0
    %942 = vmatpush1.msra.mxu0 0.0
    %943 = vmatprep.subr.mxu0 0.0
    %944 = vmatpush1.msra.mxu0 0.0
    %945 = vmatprep.subr.mxu0 0.0
    %946 = vmatpush1.msra.mxu0 0.0
    %947 = vmatprep.subr.mxu0 0.0
    %948 = vmatpush1.msra.mxu0 0.0
    %949 = vmatprep.mubr.f32.mxu0 0.0
    %950 = vmatmul.mubr.f32.gmra.mrb[0].mxu0 %v883
    %v951 = vpop.f32.mrb[0].mxu0
    %v952 = vadd.f32 %v879, %v951
    %v953 = vpop.f32.mrb[0].mxu0
    %954 = vdwg.mxu0
    %v955 = vmax.f32 %v952, 0.0
    %v956 = vld [vmem:[#allocation6 + $0x80] sm:$0xff]
    %v957 = vld [vmem:[#allocation6 + $0x88] sm:$0xff]
    %v958 = vld [vmem:[#allocation6 + $0x90] sm:$0xff]
    %v959 = vld [vmem:[#allocation6 + $0x98] sm:$0xff]
    %v960 = vld [vmem:[#allocation6 + $0xa8] sm:$0x1]
    %v961 = vlaneseq
    %v962 = vshrl.u32 %v961, 7
    %v963 = vsub.s32 0, %v962
    %v964 = vrot.slane %v960, %v963
    %v966 = vsel %vm129, %v955, 0
    %968 = vmatprep.subr.mxu0 0.0
    %969 = vmatpush1.msra.mxu0 %v956
    %970 = vmatprep.subr.mxu0 0.0
    %971 = vmatpush1.msra.mxu0 %v957
    %972 = vmatprep.subr.mxu0 0.0
    %973 = vmatpush1.msra.mxu0 %v958
    %974 = vmatprep.subr.mxu0 0.0
    %975 = vmatpush1.msra.mxu0 %v959
    %976 = vmatprep.subr.mxu0 0.0
    %977 = vmatpush1.msra.mxu0 0.0
    %978 = vmatprep.subr.mxu0 0.0
    %979 = vmatpush1.msra.mxu0 0.0
    %980 = vmatprep.subr.mxu0 0.0
    %981 = vmatpush1.msra.mxu0 0.0
    %982 = vmatprep.subr.mxu0 0.0
    %983 = vmatpush1.msra.mxu0 0.0
    %984 = vmatprep.subr.mxu0 0.0
    %985 = vmatpush1.msra.mxu0 0.0
    %986 = vmatprep.subr.mxu0 0.0
    %987 = vmatpush1.msra.mxu0 0.0
    %988 = vmatprep.subr.mxu0 0.0
    %989 = vmatpush1.msra.mxu0 0.0
    %990 = vmatprep.subr.mxu0 0.0
    %991 = vmatpush1.msra.mxu0 0.0
    %992 = vmatprep.subr.mxu0 0.0
    %993 = vmatpush1.msra.mxu0 0.0
    %994 = vmatprep.subr.mxu0 0.0
    %995 = vmatpush1.msra.mxu0 0.0
    %996 = vmatprep.subr.mxu0 0.0
    %997 = vmatpush1.msra.mxu0 0.0
    %998 = vmatprep.subr.mxu0 0.0
    %999 = vmatpush1.msra.mxu0 0.0
    %1000 = vmatprep.subr.mxu0 0.0
    %1001 = vmatpush1.msra.mxu0 0.0
    %1002 = vmatprep.subr.mxu0 0.0
    %1003 = vmatpush1.msra.mxu0 0.0
    %1004 = vmatprep.subr.mxu0 0.0
    %1005 = vmatpush1.msra.mxu0 0.0
    %1006 = vmatprep.subr.mxu0 0.0
    %1007 = vmatpush1.msra.mxu0 0.0
    %1008 = vmatprep.subr.mxu0 0.0
    %1009 = vmatpush1.msra.mxu0 0.0
    %1010 = vmatprep.subr.mxu0 0.0
    %1011 = vmatpush1.msra.mxu0 0.0
    %1012 = vmatprep.subr.mxu0 0.0
    %1013 = vmatpush1.msra.mxu0 0.0
    %1014 = vmatprep.subr.mxu0 0.0
    %1015 = vmatpush1.msra.mxu0 0.0
    %1016 = vmatprep.subr.mxu0 0.0
    %1017 = vmatpush1.msra.mxu0 0.0
    %1018 = vmatprep.subr.mxu0 0.0
    %1019 = vmatpush1.msra.mxu0 0.0
    %1020 = vmatprep.subr.mxu0 0.0
    %1021 = vmatpush1.msra.mxu0 0.0
    %1022 = vmatprep.subr.mxu0 0.0
    %1023 = vmatpush1.msra.mxu0 0.0
    %1024 = vmatprep.subr.mxu0 0.0
    %1025 = vmatpush1.msra.mxu0 0.0
    %1026 = vmatprep.subr.mxu0 0.0
    %1027 = vmatpush1.msra.mxu0 0.0
    %1028 = vmatprep.subr.mxu0 0.0
    %1029 = vmatpush1.msra.mxu0 0.0
    %1030 = vmatprep.subr.mxu0 0.0
    %1031 = vmatpush1.msra.mxu0 0.0
    %1032 = vmatprep.mubr.f32.mxu0 0.0
    %1033 = vmatmul.mubr.f32.gmra.mrb[0].mxu0 %v966
    %v1034 = vpop.f32.mrb[0].mxu0
    %v1035 = vadd.f32 %v964, %v1034
    %v1036 = vpop.f32.mrb[0].mxu0
    %1037 = vdwg.mxu0
    %1038 = vst [vmem:[#allocation7] sm:$0x3] %v1035
    // Predicated region
    $region22: #{tpu_custom_call.1} parent=1 // pred_check
      _
    $region23: #{tpu_custom_call.1} parent=1 // pred_check_branch
      %1040 = sbr.rel (0) target = $region25
    $region24: #{tpu_custom_call.1} parent=1 // pred_region
      %s1042 = ssub.s32 32, 32
      %1043 = vsyncadd [#allocation4], %s1042
      %s1045 = sshll.u32 [#allocation7], 4
      %s1046 = int_to_ptr.vmem [resolvable:$true] %s1045
      %1048 = dma.vmem_to_hbm [thread:$0]  %s1046, 32, %s3, [#allocation4]
    $region25: #{tpu_custom_call.1} parent=1 // pred_fallthru
      _
    // Predicated region
    $region26: #{tpu_custom_call.1} parent=1 // pred_check
      _
    $region27: #{tpu_custom_call.1} parent=1 // pred_check_branch
      %1050 = sbr.rel (0) target = $region29
    $region28: #{tpu_custom_call.1} parent=1 // pred_region
      %1051 = dma.done [#allocation4], 32
    $region29: #{tpu_custom_call.1} parent=1 // pred_fallthru
      _
    %1052 = vsyncpa [#allocation3], 1
    %1053 = vsyncpa [#allocation4], 1
    %1054 = vsyncpa [#allocation5], 1

</llo_original>
